<compile_context>
chip_gen: v6e
topology: v6e:2x2x1
jax: 0.10.0
libtpu: 0.0.40
codegen_flags: <defaults>
</compile_context>

<pallas_src>
import functools
import math

import jax
import jax.numpy as jnp
from jax.experimental import pallas as pl
from jax.experimental.pallas import tpu as pltpu


# ----------------------------- packed-slab layout -----------------------------
# One lane-aligned f32 slab of shape (408, 128); 4 batch items ("groups") are
# packed across the 128 lanes, each group occupying a 32-lane stripe.
#   rows   0:16   W1p   (16, 128)  block-diag of 4x fused layer-1 (4 -> 32)
#   rows  16:144  W2p   (128,128)  block-diag of 4x fused layer-2 (32 -> 32)
#   rows 144:272  W3E1p (128,128)  block-diag of 4x fused layer-3 @ E1 (32 -> 32)
#   rows 272:400  WE2p  (128,128)  block-diag of 4x E2 (32 -> 32)
#   rows 400:408  biases: 400=b1, 401=b2, 402=b3E1, 403=bE2 (tiled per group)
LANES = 128
GROUPS = 4
GROUP_W = 32
IN_F = 4
SLAB_ROWS = GROUPS * IN_F + 3 * LANES + 8       # 408

_LAYER_DIMS = {
    "A1": (2, 12), "A2": (12, 12), "A3": (12, 2),
    "B1": (2, 12), "B2": (12, 12), "B3": (12, 2),
    "E1": (4, 3),  "E2": (3, 2),
}


def init_params(key):
    """Weights stored as (in, out) (transpose of torch's (out, in)); xavier-uniform
    weights + torch-default uniform biases, matching the reference module."""
    params = {}
    names = sorted(_LAYER_DIMS)
    keys = jax.random.split(key, 2 * len(names))
    for i, name in enumerate(names):
        fin, fout = _LAYER_DIMS[name]
        a = math.sqrt(6.0 / (fin + fout))
        params["w" + name] = jax.random.uniform(
            keys[2 * i], (fin, fout), jnp.float32, -a, a)
        bound = 1.0 / math.sqrt(fin)
        params["b" + name] = jax.random.uniform(
            keys[2 * i + 1], (fout,), jnp.float32, -bound, bound)
    return params


def pack_params(p):
    """Pack all 16 parameter tensors into one (408, 128) f32 slab (lane-packed,
    block-diagonal over 4 batch groups, with layer-3 fused into E1)."""
    f32 = jnp.float32

    # ---- per-group fused blocks (group stripe is 32 lanes wide) ----
    # fused layer 1: input cols 0:2 = M, 2:4 = Phi; A-hidden -> 0:12, B -> 16:28
    w1g = jnp.zeros((IN_F, GROUP_W), f32)
    w1g = w1g.at[0:2, 0:12].set(p["wA1"]).at[2:4, 16:28].set(p["wB1"])
    # fused layer 2
    w2g = jnp.zeros((GROUP_W, GROUP_W), f32)
    w2g = w2g.at[0:12, 0:12].set(p["wA2"]).at[16:28, 16:28].set(p["wB2"])
    # fused layer 3 (32 -> 4, torch.cat order: A -> 0:2, B -> 2:4) folded into
    # E1 (4 -> 3) -- exact math, no ReLU between them in the reference module.
    w3g = jnp.zeros((GROUP_W, 4), f32)
    w3g = w3g.at[0:12, 0:2].set(p["wA3"]).at[16:28, 2:4].set(p["wB3"])
    w3e1g = jnp.zeros((GROUP_W, GROUP_W), f32).at[:, 0:3].set(w3g @ p["wE1"])
    # E2
    we2g = jnp.zeros((GROUP_W, GROUP_W), f32).at[0:3, 0:2].set(p["wE2"])

    # ---- per-group biases ----
    b1g = jnp.zeros((GROUP_W,), f32).at[0:12].set(p["bA1"]).at[16:28].set(p["bB1"])
    b2g = jnp.zeros((GROUP_W,), f32).at[0:12].set(p["bA2"]).at[16:28].set(p["bB2"])
    b3 = jnp.concatenate([p["bA3"], p["bB3"]])            # torch.cat order
    b3e1g = jnp.zeros((GROUP_W,), f32).at[0:3].set(b3 @ p["wE1"] + p["bE1"])
    be2g = jnp.zeros((GROUP_W,), f32).at[0:2].set(p["bE2"])

    # ---- replicate block-diagonally across the 4 lane-packed groups ----
    def blkdiag(w):
        k = w.shape[0]
        out = jnp.zeros((GROUPS * k, LANES), f32)
        for g in range(GROUPS):
            out = out.at[g * k:(g + 1) * k, g * GROUP_W:(g + 1) * GROUP_W].set(w)
        return out

    w1p = blkdiag(w1g)          # (16, 128)
    w2p = blkdiag(w2g)          # (128, 128)
    w3e1p = blkdiag(w3e1g)      # (128, 128)
    we2p = blkdiag(we2g)        # (128, 128)

    biases = jnp.zeros((8, LANES), f32)
    biases = biases.at[0].set(jnp.tile(b1g, GROUPS))
    biases = biases.at[1].set(jnp.tile(b2g, GROUPS))
    biases = biases.at[2].set(jnp.tile(b3e1g, GROUPS))
    biases = biases.at[3].set(jnp.tile(be2g, GROUPS))

    return jnp.concatenate([w1p, w2p, w3e1p, we2p, biases], axis=0)  # (408, 128)


# --------------------------------- kernel -------------------------------------
def dqn_kernel(x_ref, w_ref, o_ref):
    f32 = jnp.float32
    x = x_ref[...]                       # (TR, 16): 4 batch items x 4 features

    # Static, 8-row-aligned views into the single packed slab.
    w1 = w_ref[0:16, :]                  # (16, 128)
    w2 = w_ref[16:144, :]                # (128, 128)
    w3e1 = w_ref[144:272, :]             # (128, 128)
    we2 = w_ref[272:400, :]              # (128, 128)
    bias = w_ref[400:408, :]             # (8, 128)
    b1 = bias[0:1, :]
    b2 = bias[1:2, :]
    b3e1 = bias[2:3, :]
    be2 = bias[3:4, :]

    # 4 matmuls total (layer-3 pre-fused into E1 offline).
    h = jnp.maximum(jnp.dot(x, w1, preferred_element_type=f32) + b1, 0.0)
    h = jnp.maximum(jnp.dot(h, w2, preferred_element_type=f32) + b2, 0.0)
    h = jnp.maximum(jnp.dot(h, w3e1, preferred_element_type=f32) + b3e1, 0.0)
    e = jnp.dot(h, we2, preferred_element_type=f32) + be2    # cols 32g:32g+2 valid

    # Threshold in f32 (matches the torch in-place assignment); store bf16
    # (0.0 / 1.0 are exact in bf16).  Padded lanes read 1.0 but are sliced off
    # by the wrapper.
    o_ref[...] = jnp.where(e < 0.0, 0.0, 1.0).astype(o_ref.dtype)


# -------------------------------- wrapper --------------------------------------
def _round_up(n, m):
    return (n + m - 1) // m * m


_MAX_TILE_ROWS = 512        # 512 packed rows = 2048 batch items per grid step


def _tiling(b):
    """Bucketed (padded_rows, tile_rows) for a raw batch size b."""
    r = -(-b // GROUPS)                               # packed rows needed
    if r <= _MAX_TILE_ROWS:
        rp = max(8, 1 << (r - 1).bit_length())        # pow2 bucket, >= 8
        # >= 2 grid steps when there's enough work so both v7x TCs participate
        tr = rp // 2 if rp >= 128 else rp
    else:
        rp = _round_up(r, _MAX_TILE_ROWS)
        tr = _MAX_TILE_ROWS
    return rp, tr


@functools.partial(jax.jit, static_argnums=2)
def _dqn_bucket(x_pad, slab, tr):
    """x_pad: (b_pad, 4) f32 with b_pad = 4 * rp, rp % tr == 0."""
    b_pad = x_pad.shape[0]
    rp = b_pad // GROUPS
    xp = x_pad.reshape(rp, GROUPS * IN_F)             # contiguous -> free

    out = pl.pallas_call(
        dqn_kernel,
        out_shape=jax.ShapeDtypeStruct((rp, LANES), jnp.bfloat16),
        grid=(rp // tr,),
        in_specs=[
            pl.BlockSpec((tr, GROUPS * IN_F), lambda i: (i, 0)),
            # weight slab: same block every step -> stays VMEM-resident
            pl.BlockSpec((SLAB_ROWS, LANES), lambda i: (0, 0)),
        ],
        out_specs=pl.BlockSpec((tr, LANES), lambda i: (i, 0)),
        compiler_params=pltpu.CompilerParams(
            dimension_semantics=("parallel",)),
    )(xp, slab)

    # (rp, 128) -> (b_pad, 32) is a contiguous reshape; keep only the 2 logits.
    return out.reshape(b_pad, GROUPS * (LANES // GROUPS) // GROUPS * GROUPS //
                       GROUPS if False else b_pad and GROUP_W and 32)[:, :2] \
        .astype(jnp.float32) if False else \
        out.reshape(b_pad, GROUP_W)[:, :2].astype(jnp.float32)


def dqn_forward(inputs, slab):
    """inputs: (4,) or (B, 4) float32; returns (2,) or (B, 2) with 0.0/1.0."""
    x = jnp.asarray(inputs, jnp.float32)
    single = x.ndim == 1
    if single:
        x = x[None, :]
    b = x.shape[0]

    rp, tr = _tiling(b)
    b_pad = GROUPS * rp
    if b_pad != b:
        # Tail-only pad; no full padded-input materialisation in the wrapper.
        x = jnp.pad(x, ((0, b_pad - b), (0, 0)))

    # NOTE: at B == 1 custom-call dispatch dominates; production RL loops
    # should batch action selection upstream (or use plain jnp for B == 1).
    y = _dqn_bucket(x, slab, tr)
    y = y[:b]
    return y[0] if single else y


# ------------------------------ reference math ---------------------------------
def ref_forward(x_vec, p):
    """Un-fused pure-JAX reference of the original torch forward (1-D input)."""
    m, phi = x_vec[:2], x_vec[2:4]
    a = jnp.maximum(m @ p["wA1"] + p["bA1"], 0.0)
    a = jnp.maximum(a @ p["wA2"] + p["bA2"], 0.0)
    a = a @ p["wA3"] + p["bA3"]
    b = jnp.maximum(phi @ p["wB1"] + p["bB1"], 0.0)
    b = jnp.maximum(b @ p["wB2"] + p["bB2"], 0.0)
    b = b @ p["wB3"] + p["bB3"]
    e = jnp.concatenate([a, b])
    e = jnp.maximum(e @ p["wE1"] + p["bE1"], 0.0)
    logits = e @ p["wE2"] + p["bE2"]
    return jnp.where(logits < 0.0, 0.0, 1.0), logits


if __name__ == "__main__":
    key = jax.random.PRNGKey(0)
    pkey, k1, k2, k3 = jax.random.split(key, 4)
    params = init_params(pkey)
    slab = pack_params(params)

    # --- single-vector forward: (4,) -> (2,), exactly the torch module's shape.
    x1 = jax.random.normal(k1, (4,), jnp.float32)
    y1 = dqn_forward(x1, slab)
    jax.block_until_ready(y1)
    y1_ref, l1 = ref_forward(x1, params)
    assert y1.shape == (2,)
    # Allow disagreement only where the logit sits near the 0 threshold (the
    # offline W3@WE1 fusion reassociates f32 sums), otherwise require identical
    # binary output.
    assert bool(jnp.all((y1 == y1_ref) | (jnp.abs(l1) < 1e-4))), (y1, y1_ref)

    # --- odd batch: (37, 4) -> (37, 2) exercises the tail-padding path.
    xb = jax.random.normal(k2, (37, 4), jnp.float32)
    yb = dqn_forward(xb, slab)
    jax.block_until_ready(yb)
    yb_ref, lb = jax.vmap(lambda v: ref_forward(v, params))(xb)
    assert yb.shape == (37, 2)
    assert bool(jnp.all((yb == yb_ref) | (jnp.abs(lb) < 1e-4)))

    # --- larger batch: (512, 4) -> (512, 2) exercises the 2-step parallel grid.
    xc = jax.random.normal(k3, (512, 4), jnp.float32)
    yc = dqn_forward(xc, slab)
    jax.block_until_ready(yc)
    yc_ref, lc = jax.vmap(lambda v: ref_forward(v, params))(xc)
    assert yc.shape == (512, 2)
    assert bool(jnp.all((yc == yc_ref) | (jnp.abs(lc) < 1e-4)))

    print("KERNEL_OK")
</pallas_src>

<mosaic_0001>
module attributes {stable_mosaic.version = 11 : i64} {
  func.func @dqn_kernel(%arg0: i32, %arg1: memref<8x16xf32, #tpu.memory_space<vmem>>, %arg2: memref<408x128xf32, #tpu.memory_space<vmem>>, %arg3: memref<8x128xbf16, #tpu.memory_space<vmem>>) attributes {dimension_semantics = [#tpu.dimension_semantics<parallel>], iteration_bounds = array<i64: 1>, scalar_prefetch = 0 : i64, scratch_operands = 0 : i64, tpu.core_type = #tpu.core_type<tc>, window_params = [{transform_indices = @transform_0, window_bounds = array<i64: 8, 16>}, {pipeline_mode = #tpu.pipeline_mode<synchronous>, transform_indices = @transform_1, window_bounds = array<i64: 408, 128>}, {transform_indices = @transform_2, window_bounds = array<i64: 8, 128>}]} {
    %c0 = arith.constant 0 : index
    %c0_0 = arith.constant 0 : index
    %0 = vector.load %arg1[%c0, %c0_0] : memref<8x16xf32, #tpu.memory_space<vmem>>, vector<8x16xf32>
    %c0_1 = arith.constant 0 : index
    %c0_2 = arith.constant 0 : index
    %1 = vector.load %arg2[%c0_1, %c0_2] : memref<408x128xf32, #tpu.memory_space<vmem>>, vector<16x128xf32>
    %c16 = arith.constant 16 : index
    %c0_3 = arith.constant 0 : index
    %2 = vector.load %arg2[%c16, %c0_3] : memref<408x128xf32, #tpu.memory_space<vmem>>, vector<128x128xf32>
    %c144 = arith.constant 144 : index
    %c0_4 = arith.constant 0 : index
    %3 = vector.load %arg2[%c144, %c0_4] : memref<408x128xf32, #tpu.memory_space<vmem>>, vector<128x128xf32>
    %c272 = arith.constant 272 : index
    %c0_5 = arith.constant 0 : index
    %4 = vector.load %arg2[%c272, %c0_5] : memref<408x128xf32, #tpu.memory_space<vmem>>, vector<128x128xf32>
    %c400 = arith.constant 400 : index
    %c0_6 = arith.constant 0 : index
    %5 = vector.load %arg2[%c400, %c0_6] : memref<408x128xf32, #tpu.memory_space<vmem>>, vector<8x128xf32>
    %6 = vector.extract_strided_slice %5 {offsets = [0, 0], sizes = [1, 128], strides = [1, 1]} : vector<8x128xf32> to vector<1x128xf32>
    %7 = vector.extract_strided_slice %5 {offsets = [1, 0], sizes = [1, 128], strides = [1, 1]} : vector<8x128xf32> to vector<1x128xf32>
    %8 = vector.extract_strided_slice %5 {offsets = [2, 0], sizes = [1, 128], strides = [1, 1]} : vector<8x128xf32> to vector<1x128xf32>
    %9 = vector.extract_strided_slice %5 {offsets = [3, 0], sizes = [1, 128], strides = [1, 1]} : vector<8x128xf32> to vector<1x128xf32>
    %cst = arith.constant dense<0.000000e+00> : vector<8x128xf32>
    %10 = tpu.matmul %0, %1, %cst {dimension_numbers = #tpu.dot_dimension_numbers<[1], [0], [0], [1], [0, 0, 1, 1], [], []>} : vector<8x16xf32>, vector<16x128xf32>, vector<8x128xf32> -> vector<8x128xf32>
    %11 = vector.broadcast %6 : vector<1x128xf32> to vector<8x128xf32>
    %12 = arith.addf %10, %11 : vector<8x128xf32>
    %cst_7 = arith.constant 0.000000e+00 : f32
    %13 = vector.broadcast %cst_7 : f32 to vector<8x128xf32>
    %14 = arith.maximumf %12, %13 : vector<8x128xf32>
    %cst_8 = arith.constant dense<0.000000e+00> : vector<8x128xf32>
    %15 = tpu.matmul %14, %2, %cst_8 {dimension_numbers = #tpu.dot_dimension_numbers<[1], [0], [0], [1], [0, 0, 1, 1], [], []>} : vector<8x128xf32>, vector<128x128xf32>, vector<8x128xf32> -> vector<8x128xf32>
    %16 = vector.broadcast %7 : vector<1x128xf32> to vector<8x128xf32>
    %17 = arith.addf %15, %16 : vector<8x128xf32>
    %cst_9 = arith.constant 0.000000e+00 : f32
    %18 = vector.broadcast %cst_9 : f32 to vector<8x128xf32>
    %19 = arith.maximumf %17, %18 : vector<8x128xf32>
    %cst_10 = arith.constant dense<0.000000e+00> : vector<8x128xf32>
    %20 = tpu.matmul %19, %3, %cst_10 {dimension_numbers = #tpu.dot_dimension_numbers<[1], [0], [0], [1], [0, 0, 1, 1], [], []>} : vector<8x128xf32>, vector<128x128xf32>, vector<8x128xf32> -> vector<8x128xf32>
    %21 = vector.broadcast %8 : vector<1x128xf32> to vector<8x128xf32>
    %22 = arith.addf %20, %21 : vector<8x128xf32>
    %cst_11 = arith.constant 0.000000e+00 : f32
    %23 = vector.broadcast %cst_11 : f32 to vector<8x128xf32>
    %24 = arith.maximumf %22, %23 : vector<8x128xf32>
    %cst_12 = arith.constant dense<0.000000e+00> : vector<8x128xf32>
    %25 = tpu.matmul %24, %4, %cst_12 {dimension_numbers = #tpu.dot_dimension_numbers<[1], [0], [0], [1], [0, 0, 1, 1], [], []>} : vector<8x128xf32>, vector<128x128xf32>, vector<8x128xf32> -> vector<8x128xf32>
    %26 = vector.broadcast %9 : vector<1x128xf32> to vector<8x128xf32>
    %27 = arith.addf %25, %26 : vector<8x128xf32>
    %cst_13 = arith.constant 0.000000e+00 : f32
    %28 = vector.broadcast %cst_13 : f32 to vector<8x128xf32>
    %29 = arith.cmpf olt, %27, %28 : vector<8x128xf32>
    %cst_14 = arith.constant 0.000000e+00 : f32
    %cst_15 = arith.constant 1.000000e+00 : f32
    %30 = vector.broadcast %cst_14 : f32 to vector<8x128xf32>
    %31 = vector.broadcast %cst_15 : f32 to vector<8x128xf32>
    %32 = arith.select %29, %30, %31 : vector<8x128xi1>, vector<8x128xf32>
    %33 = arith.truncf %32 : vector<8x128xf32> to vector<8x128xbf16>
    %c0_16 = arith.constant 0 : index
    %c0_17 = arith.constant 0 : index
    %34 = vector.load %arg3[%c0_16, %c0_17] : memref<8x128xbf16, #tpu.memory_space<vmem>>, vector<8x128xbf16>
    tpu.vector_store %arg3[%c0_16, %c0_17], %33 {strides = array<i32>} : memref<8x128xbf16, #tpu.memory_space<vmem>>, vector<8x128xbf16>,
    return
  }
  func.func @transform_0(%arg0: i32) -> (i32, i32) {
    %c0_i32 = arith.constant 0 : i32
    %c0_i32_0 = arith.constant 0 : i32
    return %arg0, %c0_i32 : i32, i32
  }
  func.func @transform_1(%arg0: i32) -> (i32, i32) {
    %c0_i32 = arith.constant 0 : i32
    %c0_i32_0 = arith.constant 0 : i32
    %c0_i32_1 = arith.constant 0 : i32
    return %c0_i32, %c0_i32_0 : i32, i32
  }
  func.func @transform_2(%arg0: i32) -> (i32, i32) {
    %c0_i32 = arith.constant 0 : i32
    %c0_i32_0 = arith.constant 0 : i32
    return %arg0, %c0_i32 : i32, i32
  }
}

</mosaic_0001>

<llo_original>
// kernel: _dqn_bucket.1
$region0: #{_dqn_bucket.1}
  #allocation0 [shape = 'u32[]', space=smem, size = 0x4, offset = 0x4, fixed_abs, tag = 'smem constant byte address 0x4 - core index']
  #allocation1 [shape = 'u32[144,128]{1,0:T(1,128)}', space=vmem, size = 0x12000, scoped, tag = 'internal scratch']
  %s0 = inlined_call_operand.vmem [shape: f32[8,16], index: 0, kind: input, shape index: {}]
  %s1 = inlined_call_operand.hbm [shape: f32[408,128], index: 1, kind: input, shape index: {}]
  %s2 = inlined_call_operand.vmem [shape: bf16[8,128], index: 2, kind: output, shape index: {}]
  %s3 = sld [smem:[#allocation0]]
  $region22: #{_dqn_bucket.1} parent=0
    _
  %s5 = ssub.s32 1, %s3
  %s6 = scalar_select 0, %s5, %s3
  $region1: #{_dqn_bucket.1} parent=0
    #allocation2 [shape = 'u8[208896]{0}', space=vmem, size = 0x33000, scoped, tag = 'input window, operand 1, single buffered']
    #allocation3 [shape = 's32[1]{0}', space=sflag, size = 0x4, scoped, tag = 'scoped memory for _dqn_bucket.1']
    %7 = vsyncpa [#allocation3], 0
    // Predicated region
    $region2: #{_dqn_bucket.1} parent=1 // pred_check
      _
    $region3: #{_dqn_bucket.1} parent=1 // pred_check_branch
      %9 = sbr.rel (0) target = $region5
    $region4: #{_dqn_bucket.1} parent=1 // pred_region
      _
    $region5: #{_dqn_bucket.1} parent=1 // pred_fallthru
      _
    // Predicated region
    $region6: #{_dqn_bucket.1} parent=1 // pred_check
      _
    $region7: #{_dqn_bucket.1} parent=1 // pred_check_branch
      %11 = sbr.rel (0) target = $region9
    $region8: #{_dqn_bucket.1} parent=1 // pred_region
      %s13 = ssub.s32 6528, 6528
      %14 = vsyncadd [#allocation3], %s13
      %s15 = sshll.u32 [#allocation2], 4
      %s16 = int_to_ptr.vmem [resolvable:$true] %s15
      %21 = dma.hbm_to_vmem [thread:$0]  %s1, 6528, %s16, [#allocation3], 128, 128, 8
    $region9: #{_dqn_bucket.1} parent=1 // pred_fallthru
      _
    // Predicated region
    $region10: #{_dqn_bucket.1} parent=1 // pred_check
      _
    $region11: #{_dqn_bucket.1} parent=1 // pred_check_branch
      %23 = sbr.rel (0) target = $region13
    $region12: #{_dqn_bucket.1} parent=1 // pred_region
      %24 = dma.done [#allocation3], 6528
    $region13: #{_dqn_bucket.1} parent=1 // pred_fallthru
      _
    %v25 = vld [vmem:[%s0] sm:$0xff]
    %v26 = vld [vmem:[#allocation2] sm:$0xff]
    %v27 = vld [vmem:[#allocation2 + $0x8] sm:$0xff]
    %v28 = vld [vmem:[#allocation2 + $0x10] sm:$0xff]
    %v29 = vld [vmem:[#allocation2 + $0x18] sm:$0xff]
    %v30 = vld [vmem:[#allocation2 + $0x20] sm:$0xff]
    %v31 = vld [vmem:[#allocation2 + $0x28] sm:$0xff]
    %v32 = vld [vmem:[#allocation2 + $0x30] sm:$0xff]
    %v33 = vld [vmem:[#allocation2 + $0x38] sm:$0xff]
    %v34 = vld [vmem:[#allocation2 + $0x40] sm:$0xff]
    %v35 = vld [vmem:[#allocation2 + $0x48] sm:$0xff]
    %v36 = vld [vmem:[#allocation2 + $0x50] sm:$0xff]
    %v37 = vld [vmem:[#allocation2 + $0x58] sm:$0xff]
    %v38 = vld [vmem:[#allocation2 + $0x60] sm:$0xff]
    %v39 = vld [vmem:[#allocation2 + $0x68] sm:$0xff]
    %v40 = vld [vmem:[#allocation2 + $0x70] sm:$0xff]
    %v41 = vld [vmem:[#allocation2 + $0x78] sm:$0xff]
    %v42 = vld [vmem:[#allocation2 + $0x80] sm:$0xff]
    %v43 = vld [vmem:[#allocation2 + $0x88] sm:$0xff]
    %v44 = vld [vmem:[#allocation2 + $0x90] sm:$0xff]
    %v45 = vld [vmem:[#allocation2 + $0x98] sm:$0xff]
    %v46 = vld [vmem:[#allocation2 + $0xa0] sm:$0xff]
    %v47 = vld [vmem:[#allocation2 + $0xa8] sm:$0xff]
    %v48 = vld [vmem:[#allocation2 + $0xb0] sm:$0xff]
    %v49 = vld [vmem:[#allocation2 + $0xb8] sm:$0xff]
    %v50 = vld [vmem:[#allocation2 + $0xc0] sm:$0xff]
    %v51 = vld [vmem:[#allocation2 + $0xc8] sm:$0xff]
    %v52 = vld [vmem:[#allocation2 + $0xd0] sm:$0xff]
    %v53 = vld [vmem:[#allocation2 + $0xd8] sm:$0xff]
    %v54 = vld [vmem:[#allocation2 + $0xe0] sm:$0xff]
    %v55 = vld [vmem:[#allocation2 + $0xe8] sm:$0xff]
    %v56 = vld [vmem:[#allocation2 + $0xf0] sm:$0xff]
    %v57 = vld [vmem:[#allocation2 + $0xf8] sm:$0xff]
    %v58 = vld [vmem:[#allocation2 + $0x100] sm:$0xff]
    %v59 = vld [vmem:[#allocation2 + $0x108] sm:$0xff]
    %v60 = vld [vmem:[#allocation2 + $0x110] sm:$0xff]
    %v61 = vld [vmem:[#allocation2 + $0x118] sm:$0xff]
    %v62 = vld [vmem:[#allocation2 + $0x120] sm:$0xff]
    %v63 = vld [vmem:[#allocation2 + $0x128] sm:$0xff]
    %v64 = vld [vmem:[#allocation2 + $0x130] sm:$0xff]
    %v65 = vld [vmem:[#allocation2 + $0x138] sm:$0xff]
    %v66 = vld [vmem:[#allocation2 + $0x140] sm:$0xff]
    %v67 = vld [vmem:[#allocation2 + $0x148] sm:$0xff]
    %v68 = vld [vmem:[#allocation2 + $0x150] sm:$0xff]
    %v69 = vld [vmem:[#allocation2 + $0x158] sm:$0xff]
    %v70 = vld [vmem:[#allocation2 + $0x160] sm:$0xff]
    %v71 = vld [vmem:[#allocation2 + $0x168] sm:$0xff]
    %v72 = vld [vmem:[#allocation2 + $0x170] sm:$0xff]
    %v73 = vld [vmem:[#allocation2 + $0x178] sm:$0xff]
    %v74 = vld [vmem:[#allocation2 + $0x180] sm:$0xff]
    %v75 = vld [vmem:[#allocation2 + $0x188] sm:$0xff]
    %v76 = vld [vmem:[#allocation2 + $0x190] sm:$0xff]
    %v77 = vlaneseq
    %v78 = vshrl.u32 %v77, 7
    %v79 = vsub.s32 0, %v78
    %v80 = vrot.slane %v76, %v79
    %vm81 = vcmask 130048
    %v83 = vsel %vm81, %v25, 0
    %85 = vmatprep.subr.mxu0 0.0
    %86 = vmatpush1.msra.mxu0 0.0
    %87 = vmatprep.subr.mxu0 0.0
    %88 = vmatpush1.msra.mxu0 0.0
    %89 = vmatprep.subr.mxu0 0.0
    %90 = vmatpush1.msra.mxu0 0.0
    %91 = vmatprep.subr.mxu0 0.0
    %92 = vmatpush1.msra.mxu0 0.0
    %93 = vmatprep.subr.mxu0 0.0
    %94 = vmatpush1.msra.mxu0 0.0
    %95 = vmatprep.subr.mxu0 0.0
    %96 = vmatpush1.msra.mxu0 0.0
    %97 = vmatprep.subr.mxu0 0.0
    %98 = vmatpush1.msra.mxu0 0.0
    %99 = vmatprep.subr.mxu0 0.0
    %100 = vmatpush1.msra.mxu0 0.0
    %101 = vmatprep.subr.mxu0 0.0
    %102 = vmatpush1.msra.mxu0 0.0
    %103 = vmatprep.subr.mxu0 0.0
    %104 = vmatpush1.msra.mxu0 0.0
    %105 = vmatprep.subr.mxu0 0.0
    %106 = vmatpush1.msra.mxu0 0.0
    %107 = vmatprep.subr.mxu0 0.0
    %108 = vmatpush1.msra.mxu0 0.0
    %109 = vmatprep.subr.mxu0 0.0
    %110 = vmatpush1.msra.mxu0 0.0
    %111 = vmatprep.subr.mxu0 0.0
    %112 = vmatpush1.msra.mxu0 0.0
    %113 = vmatprep.subr.mxu0 0.0
    %114 = vmatpush1.msra.mxu0 %v27
    %115 = vmatprep.subr.mxu0 0.0
    %116 = vmatpush1.msra.mxu0 %v26
    %117 = vmatprep.subr.mxu0 0.0
    %118 = vmatpush2.msra.mxu0 0.0
    %119 = vmatprep.subr.mxu0 0.0
    %120 = vmatpush2.msra.mxu0 0.0
    %121 = vmatprep.subr.mxu0 0.0
    %122 = vmatpush2.msra.mxu0 0.0
    %123 = vmatprep.subr.mxu0 0.0
    %124 = vmatpush2.msra.mxu0 0.0
    %125 = vmatprep.subr.mxu0 0.0
    %126 = vmatpush2.msra.mxu0 0.0
    %127 = vmatprep.subr.mxu0 0.0
    %128 = vmatpush2.msra.mxu0 0.0
    %129 = vmatprep.subr.mxu0 0.0
    %130 = vmatpush2.msra.mxu0 0.0
    %131 = vmatprep.subr.mxu0 0.0
    %132 = vmatpush2.msra.mxu0 0.0
    %133 = vmatprep.subr.mxu0 0.0
    %134 = vmatpush2.msra.mxu0 0.0
    %135 = vmatprep.subr.mxu0 0.0
    %136 = vmatpush2.msra.mxu0 0.0
    %137 = vmatprep.subr.mxu0 0.0
    %138 = vmatpush2.msra.mxu0 0.0
    %139 = vmatprep.subr.mxu0 0.0
    %140 = vmatpush2.msra.mxu0 0.0
    %141 = vmatprep.subr.mxu0 0.0
    %142 = vmatpush2.msra.mxu0 0.0
    %143 = vmatprep.subr.mxu0 0.0
    %144 = vmatpush2.msra.mxu0 0.0
    %145 = vmatprep.subr.mxu0 0.0
    %146 = vmatpush2.msra.mxu0 0.0
    %147 = vmatprep.subr.mxu0 0.0
    %148 = vmatpush2.msra.mxu0 0.0
    %149 = vmatprep.mubr.f32.mxu0 0.0
    %150 = vmatmul.mubr.f32.gmra.mxu0 %v83
    %v151 = vpop.f32.mrf.mxu0
    %v152 = vadd.f32 %v80, %v151
    %v153 = vpop.f32.mrf.mxu0
    %154 = vdwg.mxu0
    %v155 = vmax.f32 %v152, 0.0
    %v156 = vlaneseq
    %v157 = vshrl.u32 %v156, 7
    %v158 = vsub.s32 1, %v157
    %v159 = vrot.slane %v76, %v158
    %160 = vmatprep.subr.mxu0 0.0
    %161 = vmatpush1.msra.mxu0 %v43
    %162 = vmatprep.subr.mxu0 0.0
    %163 = vmatpush1.msra.mxu0 %v42
    %164 = vmatprep.subr.mxu0 0.0
    %165 = vmatpush1.msra.mxu0 %v41
    %166 = vmatprep.subr.mxu0 0.0
    %167 = vmatpush1.msra.mxu0 %v40
    %168 = vmatprep.subr.mxu0 0.0
    %169 = vmatpush1.msra.mxu0 %v39
    %170 = vmatprep.subr.mxu0 0.0
    %171 = vmatpush1.msra.mxu0 %v38
    %172 = vmatprep.subr.mxu0 0.0
    %173 = vmatpush1.msra.mxu0 %v37
    %174 = vmatprep.subr.mxu0 0.0
    %175 = vmatpush1.msra.mxu0 %v36
    %176 = vmatprep.subr.mxu0 0.0
    %177 = vmatpush1.msra.mxu0 %v35
    %178 = vmatprep.subr.mxu0 0.0
    %179 = vmatpush1.msra.mxu0 %v34
    %180 = vmatprep.subr.mxu0 0.0
    %181 = vmatpush1.msra.mxu0 %v33
    %182 = vmatprep.subr.mxu0 0.0
    %183 = vmatpush1.msra.mxu0 %v32
    %184 = vmatprep.subr.mxu0 0.0
    %185 = vmatpush1.msra.mxu0 %v31
    %186 = vmatprep.subr.mxu0 0.0
    %187 = vmatpush1.msra.mxu0 %v30
    %188 = vmatprep.subr.mxu0 0.0
    %189 = vmatpush1.msra.mxu0 %v29
    %190 = vmatprep.subr.mxu0 0.0
    %191 = vmatpush1.msra.mxu0 %v28
    %192 = vmatprep.subr.mxu0 0.0
    %193 = vmatpush2.msra.mxu0 0.0
    %194 = vmatprep.subr.mxu0 0.0
    %195 = vmatpush2.msra.mxu0 0.0
    %196 = vmatprep.subr.mxu0 0.0
    %197 = vmatpush2.msra.mxu0 0.0
    %198 = vmatprep.subr.mxu0 0.0
    %199 = vmatpush2.msra.mxu0 0.0
    %200 = vmatprep.subr.mxu0 0.0
    %201 = vmatpush2.msra.mxu0 0.0
    %202 = vmatprep.subr.mxu0 0.0
    %203 = vmatpush2.msra.mxu0 0.0
    %204 = vmatprep.subr.mxu0 0.0
    %205 = vmatpush2.msra.mxu0 0.0
    %206 = vmatprep.subr.mxu0 0.0
    %207 = vmatpush2.msra.mxu0 0.0
    %208 = vmatprep.subr.mxu0 0.0
    %209 = vmatpush2.msra.mxu0 0.0
    %210 = vmatprep.subr.mxu0 0.0
    %211 = vmatpush2.msra.mxu0 0.0
    %212 = vmatprep.subr.mxu0 0.0
    %213 = vmatpush2.msra.mxu0 0.0
    %214 = vmatprep.subr.mxu0 0.0
    %215 = vmatpush2.msra.mxu0 0.0
    %216 = vmatprep.subr.mxu0 0.0
    %217 = vmatpush2.msra.mxu0 0.0
    %218 = vmatprep.subr.mxu0 0.0
    %219 = vmatpush2.msra.mxu0 0.0
    %220 = vmatprep.subr.mxu0 0.0
    %221 = vmatpush2.msra.mxu0 0.0
    %222 = vmatprep.subr.mxu0 0.0
    %223 = vmatpush2.msra.mxu0 0.0
    %224 = vmatprep.mubr.f32.mxu0 0.0
    %225 = vmatmul.mubr.f32.gmra.mxu0 %v155
    %v226 = vpop.f32.mrf.mxu0
    %v227 = vadd.f32 %v159, %v226
    %v228 = vpop.f32.mrf.mxu0
    %229 = vdwg.mxu0
    %v230 = vmax.f32 %v227, 0.0
    %v231 = vlaneseq
    %v232 = vshrl.u32 %v231, 7
    %v233 = vsub.s32 2, %v232
    %v234 = vrot.slane %v76, %v233
    %235 = vmatprep.subr.mxu0 0.0
    %236 = vmatpush1.msra.mxu0 %v59
    %237 = vmatprep.subr.mxu0 0.0
    %238 = vmatpush1.msra.mxu0 %v58
    %239 = vmatprep.subr.mxu0 0.0
    %240 = vmatpush1.msra.mxu0 %v57
    %241 = vmatprep.subr.mxu0 0.0
    %242 = vmatpush1.msra.mxu0 %v56
    %243 = vmatprep.subr.mxu0 0.0
    %244 = vmatpush1.msra.mxu0 %v55
    %245 = vmatprep.subr.mxu0 0.0
    %246 = vmatpush1.msra.mxu0 %v54
    %247 = vmatprep.subr.mxu0 0.0
    %248 = vmatpush1.msra.mxu0 %v53
    %249 = vmatprep.subr.mxu0 0.0
    %250 = vmatpush1.msra.mxu0 %v52
    %251 = vmatprep.subr.mxu0 0.0
    %252 = vmatpush1.msra.mxu0 %v51
    %253 = vmatprep.subr.mxu0 0.0
    %254 = vmatpush1.msra.mxu0 %v50
    %255 = vmatprep.subr.mxu0 0.0
    %256 = vmatpush1.msra.mxu0 %v49
    %257 = vmatprep.subr.mxu0 0.0
    %258 = vmatpush1.msra.mxu0 %v48
    %259 = vmatprep.subr.mxu0 0.0
    %260 = vmatpush1.msra.mxu0 %v47
    %261 = vmatprep.subr.mxu0 0.0
    %262 = vmatpush1.msra.mxu0 %v46
    %263 = vmatprep.subr.mxu0 0.0
    %264 = vmatpush1.msra.mxu0 %v45
    %265 = vmatprep.subr.mxu0 0.0
    %266 = vmatpush1.msra.mxu0 %v44
    %267 = vmatprep.subr.mxu0 0.0
    %268 = vmatpush2.msra.mxu0 0.0
    %269 = vmatprep.subr.mxu0 0.0
    %270 = vmatpush2.msra.mxu0 0.0
    %271 = vmatprep.subr.mxu0 0.0
    %272 = vmatpush2.msra.mxu0 0.0
    %273 = vmatprep.subr.mxu0 0.0
    %274 = vmatpush2.msra.mxu0 0.0
    %275 = vmatprep.subr.mxu0 0.0
    %276 = vmatpush2.msra.mxu0 0.0
    %277 = vmatprep.subr.mxu0 0.0
    %278 = vmatpush2.msra.mxu0 0.0
    %279 = vmatprep.subr.mxu0 0.0
    %280 = vmatpush2.msra.mxu0 0.0
    %281 = vmatprep.subr.mxu0 0.0
    %282 = vmatpush2.msra.mxu0 0.0
    %283 = vmatprep.subr.mxu0 0.0
    %284 = vmatpush2.msra.mxu0 0.0
    %285 = vmatprep.subr.mxu0 0.0
    %286 = vmatpush2.msra.mxu0 0.0
    %287 = vmatprep.subr.mxu0 0.0
    %288 = vmatpush2.msra.mxu0 0.0
    %289 = vmatprep.subr.mxu0 0.0
    %290 = vmatpush2.msra.mxu0 0.0
    %291 = vmatprep.subr.mxu0 0.0
    %292 = vmatpush2.msra.mxu0 0.0
    %293 = vmatprep.subr.mxu0 0.0
    %294 = vmatpush2.msra.mxu0 0.0
    %295 = vmatprep.subr.mxu0 0.0
    %296 = vmatpush2.msra.mxu0 0.0
    %297 = vmatprep.subr.mxu0 0.0
    %298 = vmatpush2.msra.mxu0 0.0
    %299 = vmatprep.mubr.f32.mxu0 0.0
    %300 = vmatmul.mubr.f32.gmra.mxu0 %v230
    %v301 = vpop.f32.mrf.mxu0
    %v302 = vadd.f32 %v234, %v301
    %v303 = vpop.f32.mrf.mxu0
    %304 = vdwg.mxu0
    %v305 = vmax.f32 %v302, 0.0
    %v306 = vlaneseq
    %v307 = vshrl.u32 %v306, 7
    %v308 = vsub.s32 3, %v307
    %v309 = vrot.slane %v76, %v308
    %310 = vmatprep.subr.mxu0 0.0
    %311 = vmatpush1.msra.mxu0 %v75
    %312 = vmatprep.subr.mxu0 0.0
    %313 = vmatpush1.msra.mxu0 %v74
    %314 = vmatprep.subr.mxu0 0.0
    %315 = vmatpush1.msra.mxu0 %v73
    %316 = vmatprep.subr.mxu0 0.0
    %317 = vmatpush1.msra.mxu0 %v72
    %318 = vmatprep.subr.mxu0 0.0
    %319 = vmatpush1.msra.mxu0 %v71
    %320 = vmatprep.subr.mxu0 0.0
    %321 = vmatpush1.msra.mxu0 %v70
    %322 = vmatprep.subr.mxu0 0.0
    %323 = vmatpush1.msra.mxu0 %v69
    %324 = vmatprep.subr.mxu0 0.0
    %325 = vmatpush1.msra.mxu0 %v68
    %326 = vmatprep.subr.mxu0 0.0
    %327 = vmatpush1.msra.mxu0 %v67
    %328 = vmatprep.subr.mxu0 0.0
    %329 = vmatpush1.msra.mxu0 %v66
    %330 = vmatprep.subr.mxu0 0.0
    %331 = vmatpush1.msra.mxu0 %v65
    %332 = vmatprep.subr.mxu0 0.0
    %333 = vmatpush1.msra.mxu0 %v64
    %334 = vmatprep.subr.mxu0 0.0
    %335 = vmatpush1.msra.mxu0 %v63
    %336 = vmatprep.subr.mxu0 0.0
    %337 = vmatpush1.msra.mxu0 %v62
    %338 = vmatprep.subr.mxu0 0.0
    %339 = vmatpush1.msra.mxu0 %v61
    %340 = vmatprep.subr.mxu0 0.0
    %341 = vmatpush1.msra.mxu0 %v60
    %342 = vmatprep.subr.mxu0 0.0
    %343 = vmatpush2.msra.mxu0 0.0
    %344 = vmatprep.subr.mxu0 0.0
    %345 = vmatpush2.msra.mxu0 0.0
    %346 = vmatprep.subr.mxu0 0.0
    %347 = vmatpush2.msra.mxu0 0.0
    %348 = vmatprep.subr.mxu0 0.0
    %349 = vmatpush2.msra.mxu0 0.0
    %350 = vmatprep.subr.mxu0 0.0
    %351 = vmatpush2.msra.mxu0 0.0
    %352 = vmatprep.subr.mxu0 0.0
    %353 = vmatpush2.msra.mxu0 0.0
    %354 = vmatprep.subr.mxu0 0.0
    %355 = vmatpush2.msra.mxu0 0.0
    %356 = vmatprep.subr.mxu0 0.0
    %357 = vmatpush2.msra.mxu0 0.0
    %358 = vmatprep.subr.mxu0 0.0
    %359 = vmatpush2.msra.mxu0 0.0
    %360 = vmatprep.subr.mxu0 0.0
    %361 = vmatpush2.msra.mxu0 0.0
    %362 = vmatprep.subr.mxu0 0.0
    %363 = vmatpush2.msra.mxu0 0.0
    %364 = vmatprep.subr.mxu0 0.0
    %365 = vmatpush2.msra.mxu0 0.0
    %366 = vmatprep.subr.mxu0 0.0
    %367 = vmatpush2.msra.mxu0 0.0
    %368 = vmatprep.subr.mxu0 0.0
    %369 = vmatpush2.msra.mxu0 0.0
    %370 = vmatprep.subr.mxu0 0.0
    %371 = vmatpush2.msra.mxu0 0.0
    %372 = vmatprep.subr.mxu0 0.0
    %373 = vmatpush2.msra.mxu0 0.0
    %374 = vmatprep.mubr.f32.mxu0 0.0
    %375 = vmatmul.mubr.f32.gmra.mxu0 %v305
    %v376 = vpop.f32.mrf.mxu0
    %v377 = vadd.f32 %v309, %v376
    %v378 = vpop.f32.mrf.mxu0
    %379 = vdwg.mxu0
    %vm380 = vcmp.lt.f32.partialorder %v377, 0.0
    %v381 = vsel %vm380, 0.0, 1.0
    %v382 = vpack.c.bf16 %v381, %v381
    %383 = vst [vmem:[%s2] sm:$0xf] %v382
    // Predicated region
    $region14: #{_dqn_bucket.1} parent=1 // pred_check
      _
    $region15: #{_dqn_bucket.1} parent=1 // pred_check_branch
      %385 = sbr.rel (0) target = $region17
    $region16: #{_dqn_bucket.1} parent=1 // pred_region
      _
    $region17: #{_dqn_bucket.1} parent=1 // pred_fallthru
      _
    // Predicated region
    $region18: #{_dqn_bucket.1} parent=1 // pred_check
      _
    $region19: #{_dqn_bucket.1} parent=1 // pred_check_branch
      %387 = sbr.rel (0) target = $region21
    $region20: #{_dqn_bucket.1} parent=1 // pred_region
      _
    $region21: #{_dqn_bucket.1} parent=1 // pred_fallthru
      _
    %388 = vsyncpa [#allocation3], 1

</llo_original>
